<compile_context>
chip_gen: v7x
topology: tpu7x:2x2x1
jax: 0.10.0
libtpu: 0.0.40
codegen_flags: <defaults>
</compile_context>

<pallas_src>
from functools import partial

import jax
import jax.numpy as jnp
from jax.experimental import pallas as pl
from jax.experimental.pallas import tpu as pltpu

_LANE = 128
_SUBLANE = 8
_STEP_OVERHEAD_ROWS = 32  # ~0.35us per grid step, expressed as "equivalent rows"


def _round_up(x, m):
    return (x + m - 1) // m * m


# --------------------------------------------------------------------------- #
# Kernel
# --------------------------------------------------------------------------- #
def _mlp_fused_kernel(*refs, num_layers, n_pads, compute_dtype):
    # refs = (x_ref, w_0, ..., w_{L-1}, b_stack_ref, o_ref)
    x_ref = refs[0]
    w_refs = refs[1:1 + num_layers]
    b_ref = refs[1 + num_layers]
    o_ref = refs[2 + num_layers]

    b_all = b_ref[...]  # (L, N_pad_max) f32, tiny
    h = x_ref[...]
    for i in range(num_layers):
        y = jnp.dot(h.astype(compute_dtype), w_refs[i][...],
                    preferred_element_type=jnp.float32)
        y = y + b_all[i, :n_pads[i]][None, :]          # bias add in f32
        if i < num_layers - 1:
            y = jnp.maximum(y, 0.0)                    # ReLU in f32
        h = y
    o_ref[...] = h.astype(o_ref.dtype)


# --------------------------------------------------------------------------- #
# Parameter init (mirrors nn.Linear: weight (out, in), bias (out,))
# --------------------------------------------------------------------------- #
def init_mlp_params(key, input_dim, hidden_dim, output_dim, num_layers):
    h = [hidden_dim] * (num_layers - 1)
    dims_in = [input_dim] + h
    dims_out = h + [output_dim]
    params = []
    for n_in, n_out in zip(dims_in, dims_out):
        key, kw, kb = jax.random.split(key, 3)
        bound = 1.0 / jnp.sqrt(n_in)
        w = jax.random.uniform(kw, (n_out, n_in), jnp.float32, -bound, bound)
        b = jax.random.uniform(kb, (n_out,), jnp.float32, -bound, bound)
        params.append((w, b))
    return params


# --------------------------------------------------------------------------- #
# One-time parameter prep: transpose, pad OUTPUT features to 128 lanes,
# pad each layer's input rows only to match the previous layer's padded output,
# cast weights to compute_dtype, stack biases into a single (L, N_pad_max) array.
# Zero padding keeps the math exact (padded rows/cols contribute nothing).
# --------------------------------------------------------------------------- #
def prepare_mlp_params(params, compute_dtype=jnp.bfloat16):
    num_layers = len(params)
    n_pads = [_round_up(w.shape[0], _LANE) for (w, _) in params]   # padded out-dims

    prepped_w = []
    prev_rows = params[0][0].shape[1]   # layer-0 contraction dim stays UNPADDED (true K)
    for li, (w, _) in enumerate(params):
        n_out, n_in = w.shape
        rows = prev_rows
        assert rows >= n_in
        w_p = jnp.zeros((rows, n_pads[li]), compute_dtype)
        w_p = w_p.at[:n_in, :n_out].set(w.T.astype(compute_dtype))
        prepped_w.append(w_p)
        prev_rows = n_pads[li]

    n_pad_max = max(n_pads)
    b_stack = jnp.zeros((num_layers, n_pad_max), jnp.float32)
    for li, (w, b) in enumerate(params):
        b_stack = b_stack.at[li, :w.shape[0]].set(b)

    return {
        "weights": prepped_w,
        "bias_stack": b_stack,
        "n_pads": tuple(n_pads),
        "in_dim": params[0][0].shape[1],
        "out_dim": params[-1][0].shape[0],
        "compute_dtype": compute_dtype,
    }


# --------------------------------------------------------------------------- #
# Generation-aware defaults
# --------------------------------------------------------------------------- #
def _generation_defaults():
    vmem_cap = None
    try:
        info = pltpu.get_tpu_info()
        vmem_cap = int(getattr(info, "vmem_capacity_bytes"))
    except Exception:
        vmem_cap = None
    kind = ""
    try:
        kind = jax.devices()[0].device_kind.lower()
    except Exception:
        pass

    is_v7 = "v7" in kind
    is_v5 = "v5" in kind
    multi_tc = is_v7 or ("v4" in kind) or ("v5p" in kind)

    if vmem_cap is None:
        vmem_cap = (64 if is_v7 else 128) * 1024 * 1024

    if vmem_cap <= 80 * 1024 * 1024:          # v7x-class: 64 MiB physical per TC
        vmem_ceiling = 48 * 1024 * 1024       # leave headroom for compiler scratch
    else:                                      # v5e/v6e/v5p: 128 MiB physical
        vmem_ceiling = 100 * 1024 * 1024

    block_m = 128 if is_v5 else 256           # v5 MXU is 128-high; v6e/v7x are 256
    return vmem_ceiling, block_m, multi_tc


def _choose_tm(M, block_m, want_two_steps):
    """Pick a batch tile minimizing padded rows + per-step overhead, preferring >=2
    grid steps on multi-TensorCore chips so 'parallel' actually splits work."""
    M8 = _round_up(M, _SUBLANE)
    block_m = max(_SUBLANE, (block_m // _SUBLANE) * _SUBLANE)
    cands = set()
    t = block_m
    while t >= _SUBLANE:
        cands.add(max(_SUBLANE, (t // _SUBLANE) * _SUBLANE))
        t //= 2
    cands.add(_SUBLANE)
    cands.add(min(M8, block_m))

    best_key, best_tm, best_pad = None, _SUBLANE, M8
    for tm in sorted(cands, reverse=True):
        m_pad = _round_up(M8, tm)
        steps = m_pad // tm
        cost = m_pad + _STEP_OVERHEAD_ROWS * steps
        needs_split_penalty = 1 if (want_two_steps and steps < 2) else 0
        key = (needs_split_penalty, cost, -tm)
        if best_key is None or key < best_key:
            best_key, best_tm, best_pad = key, tm, m_pad
    return best_tm, best_pad


# --------------------------------------------------------------------------- #
# Forward
# --------------------------------------------------------------------------- #
def mlp_forward(x, prepped, *, block_m=None):
    """x: (M, in_dim) f32 -> (M, out_dim) f32 via a single fused Pallas kernel."""
    weights = prepped["weights"]
    b_stack = prepped["bias_stack"]
    n_pads = prepped["n_pads"]
    num_layers = len(weights)
    compute_dtype = prepped["compute_dtype"]
    out_dim = prepped["out_dim"]

    M, K = x.shape
    assert K == prepped["in_dim"]
    N_pad_last = weights[-1].shape[1]

    vmem_ceiling, default_block_m, multi_tc = _generation_defaults()
    if block_m is None:
        block_m = default_block_m

    tm, M_pad = _choose_tm(M, block_m, want_two_steps=multi_tc)

    # Cast input once (halves x DMA for bf16); pad batch only when needed.
    x_op = x if x.dtype == jnp.dtype(compute_dtype) else x.astype(compute_dtype)
    if M_pad != M:
        x_op = jnp.pad(x_op, ((0, M_pad - M), (0, 0)))

    # Specs: x tiled over batch only (true K, no lane padding); weights/biases are
    # full-array VMEM-resident operands with constant index maps.
    in_specs = [pl.BlockSpec((tm, K), lambda i: (i, 0))]
    operands = [x_op]
    for w in weights:
        in_specs.append(pl.BlockSpec(w.shape, lambda i: (0, 0)))
        operands.append(w)
    in_specs.append(pl.BlockSpec(b_stack.shape, lambda i: (0, 0)))
    operands.append(b_stack)
    out_specs = pl.BlockSpec((tm, N_pad_last), lambda i: (i, 0))  # lane-dense stores

    # VMEM budget: weights/biases once + double-buffered x/out tiles + intermediates.
    wb_bytes = (sum(int(w.size) * w.dtype.itemsize for w in weights)
                + int(b_stack.size) * b_stack.dtype.itemsize)
    x_tile_bytes = tm * K * x_op.dtype.itemsize
    out_tile_bytes = tm * N_pad_last * 4
    act_bytes = 2 * tm * max(n_pads) * 4          # f32 intermediate + its narrow cast
    need = wb_bytes + 2 * (x_tile_bytes + out_tile_bytes) + act_bytes
    if need > vmem_ceiling:
        # TODO(synk): fall back to a K/N-tiled per-layer matmul instead of full fusion.
        raise ValueError(
            f"Fused MLP needs ~{need} bytes of VMEM but the per-core ceiling is "
            f"{vmem_ceiling}; reduce hidden_dim/block_m or use a tiled fallback.")
    vmem_limit = int(min(vmem_ceiling, max(32 * 1024 * 1024, need + 8 * 1024 * 1024)))

    flops = sum(2 * M_pad * w.shape[0] * w.shape[1] for w in weights)
    bytes_accessed = (int(x_op.size) * x_op.dtype.itemsize + wb_bytes
                      + M_pad * N_pad_last * 4)

    out_padded = pl.pallas_call(
        partial(_mlp_fused_kernel, num_layers=num_layers, n_pads=n_pads,
                compute_dtype=compute_dtype),
        out_shape=jax.ShapeDtypeStruct((M_pad, N_pad_last), jnp.float32),
        grid=(M_pad // tm,),
        in_specs=in_specs,
        out_specs=out_specs,
        compiler_params=pltpu.CompilerParams(
            dimension_semantics=("parallel",),   # batch tiles shard across TCs
            vmem_limit_bytes=vmem_limit,
        ),
        cost_estimate=pl.CostEstimate(
            flops=int(flops), transcendentals=0,
            bytes_accessed=int(bytes_accessed)),
    )(*operands)

    return out_padded[:M, :out_dim]


# --------------------------------------------------------------------------- #
# Pure-JAX reference
# --------------------------------------------------------------------------- #
def mlp_forward_ref(x, params):
    num_layers = len(params)
    for i, (w, b) in enumerate(params):
        y = x @ w.T + b
        x = jnp.maximum(y, 0.0) if i < num_layers - 1 else y
    return x


if __name__ == "__main__":
    key = jax.random.PRNGKey(0)
    kx, kp = jax.random.split(key)

    batch = 8
    input_dim, hidden_dim, output_dim, num_layers = 32, 64, 16, 3

    x = jax.random.normal(kx, (batch, input_dim), jnp.float32)
    params = init_mlp_params(kp, input_dim, hidden_dim, output_dim, num_layers)
    ref = mlp_forward_ref(x, params)

    # f32 path: strict check that the fused/padded kernel is numerically exact.
    prepped_f32 = prepare_mlp_params(params, compute_dtype=jnp.float32)
    out_f32 = jax.block_until_ready(mlp_forward(x, prepped_f32))
    assert out_f32.shape == (batch, output_dim)
    assert jnp.allclose(out_f32, ref, atol=1e-5, rtol=1e-5)

    # bf16 path (the performance default on v6e/v7x): looser tolerance.
    prepped_bf16 = prepare_mlp_params(params)  # compute_dtype=jnp.bfloat16
    out_bf16 = jax.block_until_ready(mlp_forward(x, prepped_bf16))
    assert out_bf16.shape == (batch, output_dim)
    assert jnp.allclose(out_bf16, ref, atol=7.5e-2, rtol=7.5e-2)

    print("KERNEL_OK")
</pallas_src>

<mosaic_0001>
module attributes {stable_mosaic.version = 11 : i64} {
  func.func @_mlp_fused_kernel(%arg0: i32, %arg1: memref<8x32xf32, #tpu.memory_space<vmem>>, %arg2: memref<32x128xf32, #tpu.memory_space<vmem>>, %arg3: memref<128x128xf32, #tpu.memory_space<vmem>>, %arg4: memref<128x128xf32, #tpu.memory_space<vmem>>, %arg5: memref<3x128xf32, #tpu.memory_space<vmem>>, %arg6: memref<8x128xf32, #tpu.memory_space<vmem>>) attributes {dimension_semantics = [#tpu.dimension_semantics<parallel>], iteration_bounds = array<i64: 1>, scalar_prefetch = 0 : i64, scratch_operands = 0 : i64, tpu.core_type = #tpu.core_type<tc>, window_params = [{transform_indices = @transform_0, window_bounds = array<i64: 8, 32>}, {pipeline_mode = #tpu.pipeline_mode<synchronous>, transform_indices = @transform_1, window_bounds = array<i64: 32, 128>}, {pipeline_mode = #tpu.pipeline_mode<synchronous>, transform_indices = @transform_2, window_bounds = array<i64: 128, 128>}, {pipeline_mode = #tpu.pipeline_mode<synchronous>, transform_indices = @transform_3, window_bounds = array<i64: 128, 128>}, {pipeline_mode = #tpu.pipeline_mode<synchronous>, transform_indices = @transform_4, window_bounds = array<i64: 3, 128>}, {transform_indices = @transform_5, window_bounds = array<i64: 8, 128>}]} {
    %c0 = arith.constant 0 : index
    %c0_0 = arith.constant 0 : index
    %0 = vector.load %arg5[%c0, %c0_0] : memref<3x128xf32, #tpu.memory_space<vmem>>, vector<3x128xf32>
    %c0_1 = arith.constant 0 : index
    %c0_2 = arith.constant 0 : index
    %1 = vector.load %arg1[%c0_1, %c0_2] : memref<8x32xf32, #tpu.memory_space<vmem>>, vector<8x32xf32>
    %c0_3 = arith.constant 0 : index
    %c0_4 = arith.constant 0 : index
    %2 = vector.load %arg2[%c0_3, %c0_4] : memref<32x128xf32, #tpu.memory_space<vmem>>, vector<32x128xf32>
    %cst = arith.constant dense<0.000000e+00> : vector<8x128xf32>
    %3 = tpu.matmul %1, %2, %cst {dimension_numbers = #tpu.dot_dimension_numbers<[1], [0], [0], [1], [0, 0, 1, 1], [], []>} : vector<8x32xf32>, vector<32x128xf32>, vector<8x128xf32> -> vector<8x128xf32>
    %4 = vector.extract_strided_slice %0 {offsets = [0, 0], sizes = [1, 128], strides = [1, 1]} : vector<3x128xf32> to vector<1x128xf32>
    %5 = vector.shape_cast %4 : vector<1x128xf32> to vector<128xf32>
    %6 = vector.shape_cast %5 : vector<128xf32> to vector<1x128xf32>
    %7 = vector.broadcast %6 : vector<1x128xf32> to vector<8x128xf32>
    %8 = arith.addf %3, %7 : vector<8x128xf32>
    %cst_5 = arith.constant 0.000000e+00 : f32
    %9 = vector.broadcast %cst_5 : f32 to vector<8x128xf32>
    %10 = arith.maximumf %8, %9 : vector<8x128xf32>
    %c0_6 = arith.constant 0 : index
    %c0_7 = arith.constant 0 : index
    %11 = vector.load %arg3[%c0_6, %c0_7] : memref<128x128xf32, #tpu.memory_space<vmem>>, vector<128x128xf32>
    %cst_8 = arith.constant dense<0.000000e+00> : vector<8x128xf32>
    %12 = tpu.matmul %10, %11, %cst_8 {dimension_numbers = #tpu.dot_dimension_numbers<[1], [0], [0], [1], [0, 0, 1, 1], [], []>} : vector<8x128xf32>, vector<128x128xf32>, vector<8x128xf32> -> vector<8x128xf32>
    %13 = vector.extract_strided_slice %0 {offsets = [1, 0], sizes = [1, 128], strides = [1, 1]} : vector<3x128xf32> to vector<1x128xf32>
    %14 = vector.shape_cast %13 : vector<1x128xf32> to vector<128xf32>
    %15 = vector.shape_cast %14 : vector<128xf32> to vector<1x128xf32>
    %16 = vector.broadcast %15 : vector<1x128xf32> to vector<8x128xf32>
    %17 = arith.addf %12, %16 : vector<8x128xf32>
    %cst_9 = arith.constant 0.000000e+00 : f32
    %18 = vector.broadcast %cst_9 : f32 to vector<8x128xf32>
    %19 = arith.maximumf %17, %18 : vector<8x128xf32>
    %c0_10 = arith.constant 0 : index
    %c0_11 = arith.constant 0 : index
    %20 = vector.load %arg4[%c0_10, %c0_11] : memref<128x128xf32, #tpu.memory_space<vmem>>, vector<128x128xf32>
    %cst_12 = arith.constant dense<0.000000e+00> : vector<8x128xf32>
    %21 = tpu.matmul %19, %20, %cst_12 {dimension_numbers = #tpu.dot_dimension_numbers<[1], [0], [0], [1], [0, 0, 1, 1], [], []>} : vector<8x128xf32>, vector<128x128xf32>, vector<8x128xf32> -> vector<8x128xf32>
    %22 = vector.extract_strided_slice %0 {offsets = [2, 0], sizes = [1, 128], strides = [1, 1]} : vector<3x128xf32> to vector<1x128xf32>
    %23 = vector.shape_cast %22 : vector<1x128xf32> to vector<128xf32>
    %24 = vector.shape_cast %23 : vector<128xf32> to vector<1x128xf32>
    %25 = vector.broadcast %24 : vector<1x128xf32> to vector<8x128xf32>
    %26 = arith.addf %21, %25 : vector<8x128xf32>
    %c0_13 = arith.constant 0 : index
    %c0_14 = arith.constant 0 : index
    %27 = vector.load %arg6[%c0_13, %c0_14] : memref<8x128xf32, #tpu.memory_space<vmem>>, vector<8x128xf32>
    tpu.vector_store %arg6[%c0_13, %c0_14], %26 {strides = array<i32>} : memref<8x128xf32, #tpu.memory_space<vmem>>, vector<8x128xf32>,
    return
  }
  func.func @transform_0(%arg0: i32) -> (i32, i32) {
    %c0_i32 = arith.constant 0 : i32
    %c0_i32_0 = arith.constant 0 : i32
    return %arg0, %c0_i32 : i32, i32
  }
  func.func @transform_1(%arg0: i32) -> (i32, i32) {
    %c0_i32 = arith.constant 0 : i32
    %c0_i32_0 = arith.constant 0 : i32
    %c0_i32_1 = arith.constant 0 : i32
    return %c0_i32, %c0_i32_0 : i32, i32
  }
  func.func @transform_2(%arg0: i32) -> (i32, i32) {
    %c0_i32 = arith.constant 0 : i32
    %c0_i32_0 = arith.constant 0 : i32
    %c0_i32_1 = arith.constant 0 : i32
    return %c0_i32, %c0_i32_0 : i32, i32
  }
  func.func @transform_3(%arg0: i32) -> (i32, i32) {
    %c0_i32 = arith.constant 0 : i32
    %c0_i32_0 = arith.constant 0 : i32
    %c0_i32_1 = arith.constant 0 : i32
    return %c0_i32, %c0_i32_0 : i32, i32
  }
  func.func @transform_4(%arg0: i32) -> (i32, i32) {
    %c0_i32 = arith.constant 0 : i32
    %c0_i32_0 = arith.constant 0 : i32
    %c0_i32_1 = arith.constant 0 : i32
    return %c0_i32, %c0_i32_0 : i32, i32
  }
  func.func @transform_5(%arg0: i32) -> (i32, i32) {
    %c0_i32 = arith.constant 0 : i32
    %c0_i32_0 = arith.constant 0 : i32
    return %arg0, %c0_i32 : i32, i32
  }
}

</mosaic_0001>

<llo_original>
// kernel: tpu_custom_call.1
$region0: #{tpu_custom_call.1}
  #allocation0 [shape = 'u32[]', space=smem, size = 0x4, offset = 0x4, fixed_abs, tag = 'smem constant byte address 0x4 - core index']
  #allocation1 [shape = 'u32[144,128]{1,0:T(1,128)}', space=vmem, size = 0x12000, scoped, tag = 'internal scratch']
  %s0 = inlined_call_operand.hbm [shape: f32[8,32], index: 0, kind: input, shape index: {}]
  %s1 = inlined_call_operand.hbm [shape: f32[32,128], index: 1, kind: input, shape index: {}]
  %s2 = inlined_call_operand.hbm [shape: f32[128,128], index: 2, kind: input, shape index: {}]
  %s3 = inlined_call_operand.hbm [shape: f32[128,128], index: 3, kind: input, shape index: {}]
  %s4 = inlined_call_operand.vmem [shape: f32[3,128], index: 4, kind: input, shape index: {}]
  %s5 = inlined_call_operand.hbm [shape: f32[8,128], index: 5, kind: output, shape index: {}]
  %s6 = sld [smem:[#allocation0]]
  $region46: #{tpu_custom_call.1} parent=0
    _
  %s8 = ssub.s32 1, %s6
  %s9 = scalar_select 0, %s8, %s6
  $region1: #{tpu_custom_call.1} parent=0
    #allocation2 [shape = 'u8[4096]{0}', space=vmem, size = 0x1000, scoped, tag = 'input window, operand 0, single buffered']
    #allocation3 [shape = 's32[1]{0}', space=sflag, size = 0x4, scoped, tag = 'scoped memory for tpu_custom_call.1']
    #allocation4 [shape = 's32[1]{0}', space=sflag, size = 0x4, scoped, tag = 'scoped memory for tpu_custom_call.1']
    #allocation5 [shape = 'u8[16384]{0}', space=vmem, size = 0x4000, scoped, tag = 'input window, operand 1, single buffered']
    #allocation6 [shape = 's32[1]{0}', space=sflag, size = 0x4, scoped, tag = 'scoped memory for tpu_custom_call.1']
    #allocation7 [shape = 'u8[65536]{0}', space=vmem, size = 0x10000, scoped, tag = 'input window, operand 2, single buffered']
    #allocation8 [shape = 'u8[65536]{0}', space=vmem, size = 0x10000, scoped, tag = 'input window, operand 3, single buffered']
    #allocation9 [shape = 's32[1]{0}', space=sflag, size = 0x4, scoped, tag = 'scoped memory for tpu_custom_call.1']
    #allocation10 [shape = 'u8[4096]{0}', space=vmem, size = 0x1000, scoped, tag = 'output window, operand 0, single buffered']
    %10 = vsyncpa [#allocation3], 0
    %11 = vsyncpa [#allocation6], 0
    %12 = vsyncpa [#allocation9], 0
    %13 = vsyncpa [#allocation4], 0
    // Predicated region
    $region2: #{tpu_custom_call.1} parent=1 // pred_check
      _
    $region3: #{tpu_custom_call.1} parent=1 // pred_check_branch
      %15 = sbr.rel (0) target = $region5
    $region4: #{tpu_custom_call.1} parent=1 // pred_region
      %s17 = ssub.s32 128, 128
      %18 = vsyncadd [#allocation3], %s17
      %s20 = sshll.u32 [#allocation2], 4
      %s21 = int_to_ptr.vmem [resolvable:$true] %s20
      %23 = dma.hbm_to_vmem [thread:$0]  %s0, 128, %s21, [#allocation3]
    $region5: #{tpu_custom_call.1} parent=1 // pred_fallthru
      _
    // Predicated region
    $region6: #{tpu_custom_call.1} parent=1 // pred_check
      _
    $region7: #{tpu_custom_call.1} parent=1 // pred_check_branch
      %25 = sbr.rel (0) target = $region9
    $region8: #{tpu_custom_call.1} parent=1 // pred_region
      %s27 = ssub.s32 512, 512
      %28 = vsyncadd [#allocation6], %s27
      %s29 = sshll.u32 [#allocation5], 4
      %s30 = int_to_ptr.vmem [resolvable:$true] %s29
      %35 = dma.hbm_to_vmem [thread:$0]  %s1, 512, %s30, [#allocation6], 128, 128, 8
    $region9: #{tpu_custom_call.1} parent=1 // pred_fallthru
      _
    // Predicated region
    $region10: #{tpu_custom_call.1} parent=1 // pred_check
      _
    $region11: #{tpu_custom_call.1} parent=1 // pred_check_branch
      %37 = sbr.rel (0) target = $region13
    $region12: #{tpu_custom_call.1} parent=1 // pred_region
      %s39 = ssub.s32 2048, 2048
      %40 = vsyncadd [#allocation6], %s39
      %s41 = sshll.u32 [#allocation7], 4
      %s42 = int_to_ptr.vmem [resolvable:$true] %s41
      %47 = dma.hbm_to_vmem [thread:$0]  %s2, 2048, %s42, [#allocation6], 128, 128, 8
    $region13: #{tpu_custom_call.1} parent=1 // pred_fallthru
      _
    // Predicated region
    $region14: #{tpu_custom_call.1} parent=1 // pred_check
      _
    $region15: #{tpu_custom_call.1} parent=1 // pred_check_branch
      %49 = sbr.rel (0) target = $region17
    $region16: #{tpu_custom_call.1} parent=1 // pred_region
      %s51 = ssub.s32 2048, 2048
      %52 = vsyncadd [#allocation9], %s51
      %s53 = sshll.u32 [#allocation8], 4
      %s54 = int_to_ptr.vmem [resolvable:$true] %s53
      %59 = dma.hbm_to_vmem [thread:$0]  %s3, 2048, %s54, [#allocation9], 128, 128, 8
    $region17: #{tpu_custom_call.1} parent=1 // pred_fallthru
      _
    // Predicated region
    $region18: #{tpu_custom_call.1} parent=1 // pred_check
      _
    $region19: #{tpu_custom_call.1} parent=1 // pred_check_branch
      %61 = sbr.rel (0) target = $region21
    $region20: #{tpu_custom_call.1} parent=1 // pred_region
      _
    $region21: #{tpu_custom_call.1} parent=1 // pred_fallthru
      _
    // Predicated region
    $region22: #{tpu_custom_call.1} parent=1 // pred_check
      _
    $region23: #{tpu_custom_call.1} parent=1 // pred_check_branch
      %63 = sbr.rel (0) target = $region25
    $region24: #{tpu_custom_call.1} parent=1 // pred_region
      %64 = dma.done [#allocation3], 128
    $region25: #{tpu_custom_call.1} parent=1 // pred_fallthru
      _
    // Predicated region
    $region26: #{tpu_custom_call.1} parent=1 // pred_check
      _
    $region27: #{tpu_custom_call.1} parent=1 // pred_check_branch
      %66 = sbr.rel (0) target = $region29
    $region28: #{tpu_custom_call.1} parent=1 // pred_region
      %67 = dma.done [#allocation6], 512
    $region29: #{tpu_custom_call.1} parent=1 // pred_fallthru
      _
    // Predicated region
    $region30: #{tpu_custom_call.1} parent=1 // pred_check
      _
    $region31: #{tpu_custom_call.1} parent=1 // pred_check_branch
      %69 = sbr.rel (0) target = $region33
    $region32: #{tpu_custom_call.1} parent=1 // pred_region
      %70 = dma.done [#allocation6], 2048
    $region33: #{tpu_custom_call.1} parent=1 // pred_fallthru
      _
    // Predicated region
    $region34: #{tpu_custom_call.1} parent=1 // pred_check
      _
    $region35: #{tpu_custom_call.1} parent=1 // pred_check_branch
      %72 = sbr.rel (0) target = $region37
    $region36: #{tpu_custom_call.1} parent=1 // pred_region
      %73 = dma.done [#allocation9], 2048
    $region37: #{tpu_custom_call.1} parent=1 // pred_fallthru
      _
    %v74 = vld [vmem:[%s4] sm:$0x7]
    %v75 = vld [vmem:[#allocation2] sm:$0xff]
    %v76 = vld [vmem:[#allocation5] sm:$0xff]
    %v77 = vld [vmem:[#allocation5 + $0x8] sm:$0xff]
    %v78 = vld [vmem:[#allocation5 + $0x10] sm:$0xff]
    %v79 = vld [vmem:[#allocation5 + $0x18] sm:$0xff]
    %v80 = vlaneseq
    %v81 = vshrl.u32 %v80, 7
    %v82 = vsub.s32 0, %v81
    %v83 = vrot.slane %v74, %v82
    %vm84 = vcmask 261120
    %v86 = vsel %vm84, %v75, 0
    %88 = vmatprep.subr.mxu0 0.0
    %89 = vmatpush1.msra.mxu0 %v76
    %90 = vmatprep.subr.mxu0 0.0
    %91 = vmatpush1.msra.mxu0 %v77
    %92 = vmatprep.subr.mxu0 0.0
    %93 = vmatpush1.msra.mxu0 %v78
    %94 = vmatprep.subr.mxu0 0.0
    %95 = vmatpush1.msra.mxu0 %v79
    %96 = vmatprep.subr.mxu0 0.0
    %97 = vmatpush1.msra.mxu0 0.0
    %98 = vmatprep.subr.mxu0 0.0
    %99 = vmatpush1.msra.mxu0 0.0
    %100 = vmatprep.subr.mxu0 0.0
    %101 = vmatpush1.msra.mxu0 0.0
    %102 = vmatprep.subr.mxu0 0.0
    %103 = vmatpush1.msra.mxu0 0.0
    %104 = vmatprep.subr.mxu0 0.0
    %105 = vmatpush1.msra.mxu0 0.0
    %106 = vmatprep.subr.mxu0 0.0
    %107 = vmatpush1.msra.mxu0 0.0
    %108 = vmatprep.subr.mxu0 0.0
    %109 = vmatpush1.msra.mxu0 0.0
    %110 = vmatprep.subr.mxu0 0.0
    %111 = vmatpush1.msra.mxu0 0.0
    %112 = vmatprep.subr.mxu0 0.0
    %113 = vmatpush1.msra.mxu0 0.0
    %114 = vmatprep.subr.mxu0 0.0
    %115 = vmatpush1.msra.mxu0 0.0
    %116 = vmatprep.subr.mxu0 0.0
    %117 = vmatpush1.msra.mxu0 0.0
    %118 = vmatprep.subr.mxu0 0.0
    %119 = vmatpush1.msra.mxu0 0.0
    %120 = vmatprep.subr.mxu0 0.0
    %121 = vmatpush1.msra.mxu0 0.0
    %122 = vmatprep.subr.mxu0 0.0
    %123 = vmatpush1.msra.mxu0 0.0
    %124 = vmatprep.subr.mxu0 0.0
    %125 = vmatpush1.msra.mxu0 0.0
    %126 = vmatprep.subr.mxu0 0.0
    %127 = vmatpush1.msra.mxu0 0.0
    %128 = vmatprep.subr.mxu0 0.0
    %129 = vmatpush1.msra.mxu0 0.0
    %130 = vmatprep.subr.mxu0 0.0
    %131 = vmatpush1.msra.mxu0 0.0
    %132 = vmatprep.subr.mxu0 0.0
    %133 = vmatpush1.msra.mxu0 0.0
    %134 = vmatprep.subr.mxu0 0.0
    %135 = vmatpush1.msra.mxu0 0.0
    %136 = vmatprep.subr.mxu0 0.0
    %137 = vmatpush1.msra.mxu0 0.0
    %138 = vmatprep.subr.mxu0 0.0
    %139 = vmatpush1.msra.mxu0 0.0
    %140 = vmatprep.subr.mxu0 0.0
    %141 = vmatpush1.msra.mxu0 0.0
    %142 = vmatprep.subr.mxu0 0.0
    %143 = vmatpush1.msra.mxu0 0.0
    %144 = vmatprep.subr.mxu0 0.0
    %145 = vmatpush1.msra.mxu0 0.0
    %146 = vmatprep.subr.mxu0 0.0
    %147 = vmatpush1.msra.mxu0 0.0
    %148 = vmatprep.subr.mxu0 0.0
    %149 = vmatpush1.msra.mxu0 0.0
    %150 = vmatprep.subr.mxu0 0.0
    %151 = vmatpush1.msra.mxu0 0.0
    %152 = vmatprep.mubr.f32.mxu0 0.0
    %153 = vmatmul.mubr.f32.gmra.mrb[0].mxu0 %v86
    %v154 = vpop.f32.mrb[0].mxu0
    %v155 = vadd.f32 %v83, %v154
    %v156 = vpop.f32.mrb[0].mxu0
    %157 = vdwg.mxu0
    %v158 = vmax.f32 %v155, 0.0
    %v159 = vld [vmem:[#allocation7] sm:$0xff]
    %v160 = vld [vmem:[#allocation7 + $0x8] sm:$0xff]
    %v161 = vld [vmem:[#allocation7 + $0x10] sm:$0xff]
    %v162 = vld [vmem:[#allocation7 + $0x18] sm:$0xff]
    %v163 = vld [vmem:[#allocation7 + $0x20] sm:$0xff]
    %v164 = vld [vmem:[#allocation7 + $0x28] sm:$0xff]
    %v165 = vld [vmem:[#allocation7 + $0x30] sm:$0xff]
    %v166 = vld [vmem:[#allocation7 + $0x38] sm:$0xff]
    %v167 = vld [vmem:[#allocation7 + $0x40] sm:$0xff]
    %v168 = vld [vmem:[#allocation7 + $0x48] sm:$0xff]
    %v169 = vld [vmem:[#allocation7 + $0x50] sm:$0xff]
    %v170 = vld [vmem:[#allocation7 + $0x58] sm:$0xff]
    %v171 = vld [vmem:[#allocation7 + $0x60] sm:$0xff]
    %v172 = vld [vmem:[#allocation7 + $0x68] sm:$0xff]
    %v173 = vld [vmem:[#allocation7 + $0x70] sm:$0xff]
    %v174 = vld [vmem:[#allocation7 + $0x78] sm:$0xff]
    %v175 = vlaneseq
    %v176 = vshrl.u32 %v175, 7
    %v177 = vsub.s32 1, %v176
    %v178 = vrot.slane %v74, %v177
    %179 = vmatprep.subr.mxu0 0.0
    %180 = vmatpush1.msra.mxu0 %v159
    %181 = vmatprep.subr.mxu0 0.0
    %182 = vmatpush1.msra.mxu0 %v160
    %183 = vmatprep.subr.mxu0 0.0
    %184 = vmatpush1.msra.mxu0 %v161
    %185 = vmatprep.subr.mxu0 0.0
    %186 = vmatpush1.msra.mxu0 %v162
    %187 = vmatprep.subr.mxu0 0.0
    %188 = vmatpush1.msra.mxu0 %v163
    %189 = vmatprep.subr.mxu0 0.0
    %190 = vmatpush1.msra.mxu0 %v164
    %191 = vmatprep.subr.mxu0 0.0
    %192 = vmatpush1.msra.mxu0 %v165
    %193 = vmatprep.subr.mxu0 0.0
    %194 = vmatpush1.msra.mxu0 %v166
    %195 = vmatprep.subr.mxu0 0.0
    %196 = vmatpush1.msra.mxu0 %v167
    %197 = vmatprep.subr.mxu0 0.0
    %198 = vmatpush1.msra.mxu0 %v168
    %199 = vmatprep.subr.mxu0 0.0
    %200 = vmatpush1.msra.mxu0 %v169
    %201 = vmatprep.subr.mxu0 0.0
    %202 = vmatpush1.msra.mxu0 %v170
    %203 = vmatprep.subr.mxu0 0.0
    %204 = vmatpush1.msra.mxu0 %v171
    %205 = vmatprep.subr.mxu0 0.0
    %206 = vmatpush1.msra.mxu0 %v172
    %207 = vmatprep.subr.mxu0 0.0
    %208 = vmatpush1.msra.mxu0 %v173
    %209 = vmatprep.subr.mxu0 0.0
    %210 = vmatpush1.msra.mxu0 %v174
    %211 = vmatprep.subr.mxu0 0.0
    %212 = vmatpush1.msra.mxu0 0.0
    %213 = vmatprep.subr.mxu0 0.0
    %214 = vmatpush1.msra.mxu0 0.0
    %215 = vmatprep.subr.mxu0 0.0
    %216 = vmatpush1.msra.mxu0 0.0
    %217 = vmatprep.subr.mxu0 0.0
    %218 = vmatpush1.msra.mxu0 0.0
    %219 = vmatprep.subr.mxu0 0.0
    %220 = vmatpush1.msra.mxu0 0.0
    %221 = vmatprep.subr.mxu0 0.0
    %222 = vmatpush1.msra.mxu0 0.0
    %223 = vmatprep.subr.mxu0 0.0
    %224 = vmatpush1.msra.mxu0 0.0
    %225 = vmatprep.subr.mxu0 0.0
    %226 = vmatpush1.msra.mxu0 0.0
    %227 = vmatprep.subr.mxu0 0.0
    %228 = vmatpush1.msra.mxu0 0.0
    %229 = vmatprep.subr.mxu0 0.0
    %230 = vmatpush1.msra.mxu0 0.0
    %231 = vmatprep.subr.mxu0 0.0
    %232 = vmatpush1.msra.mxu0 0.0
    %233 = vmatprep.subr.mxu0 0.0
    %234 = vmatpush1.msra.mxu0 0.0
    %235 = vmatprep.subr.mxu0 0.0
    %236 = vmatpush1.msra.mxu0 0.0
    %237 = vmatprep.subr.mxu0 0.0
    %238 = vmatpush1.msra.mxu0 0.0
    %239 = vmatprep.subr.mxu0 0.0
    %240 = vmatpush1.msra.mxu0 0.0
    %241 = vmatprep.subr.mxu0 0.0
    %242 = vmatpush1.msra.mxu0 0.0
    %243 = vmatprep.mubr.f32.mxu0 0.0
    %244 = vmatmul.mubr.f32.gmra.mrb[0].mxu0 %v158
    %v245 = vpop.f32.mrb[0].mxu0
    %v246 = vadd.f32 %v178, %v245
    %v247 = vpop.f32.mrb[0].mxu0
    %248 = vdwg.mxu0
    %v249 = vmax.f32 %v246, 0.0
    %v250 = vld [vmem:[#allocation8] sm:$0xff]
    %v251 = vld [vmem:[#allocation8 + $0x8] sm:$0xff]
    %v252 = vld [vmem:[#allocation8 + $0x10] sm:$0xff]
    %v253 = vld [vmem:[#allocation8 + $0x18] sm:$0xff]
    %v254 = vld [vmem:[#allocation8 + $0x20] sm:$0xff]
    %v255 = vld [vmem:[#allocation8 + $0x28] sm:$0xff]
    %v256 = vld [vmem:[#allocation8 + $0x30] sm:$0xff]
    %v257 = vld [vmem:[#allocation8 + $0x38] sm:$0xff]
    %v258 = vld [vmem:[#allocation8 + $0x40] sm:$0xff]
    %v259 = vld [vmem:[#allocation8 + $0x48] sm:$0xff]
    %v260 = vld [vmem:[#allocation8 + $0x50] sm:$0xff]
    %v261 = vld [vmem:[#allocation8 + $0x58] sm:$0xff]
    %v262 = vld [vmem:[#allocation8 + $0x60] sm:$0xff]
    %v263 = vld [vmem:[#allocation8 + $0x68] sm:$0xff]
    %v264 = vld [vmem:[#allocation8 + $0x70] sm:$0xff]
    %v265 = vld [vmem:[#allocation8 + $0x78] sm:$0xff]
    %v266 = vlaneseq
    %v267 = vshrl.u32 %v266, 7
    %v268 = vsub.s32 2, %v267
    %v269 = vrot.slane %v74, %v268
    %270 = vmatprep.subr.mxu0 0.0
    %271 = vmatpush1.msra.mxu0 %v250
    %272 = vmatprep.subr.mxu0 0.0
    %273 = vmatpush1.msra.mxu0 %v251
    %274 = vmatprep.subr.mxu0 0.0
    %275 = vmatpush1.msra.mxu0 %v252
    %276 = vmatprep.subr.mxu0 0.0
    %277 = vmatpush1.msra.mxu0 %v253
    %278 = vmatprep.subr.mxu0 0.0
    %279 = vmatpush1.msra.mxu0 %v254
    %280 = vmatprep.subr.mxu0 0.0
    %281 = vmatpush1.msra.mxu0 %v255
    %282 = vmatprep.subr.mxu0 0.0
    %283 = vmatpush1.msra.mxu0 %v256
    %284 = vmatprep.subr.mxu0 0.0
    %285 = vmatpush1.msra.mxu0 %v257
    %286 = vmatprep.subr.mxu0 0.0
    %287 = vmatpush1.msra.mxu0 %v258
    %288 = vmatprep.subr.mxu0 0.0
    %289 = vmatpush1.msra.mxu0 %v259
    %290 = vmatprep.subr.mxu0 0.0
    %291 = vmatpush1.msra.mxu0 %v260
    %292 = vmatprep.subr.mxu0 0.0
    %293 = vmatpush1.msra.mxu0 %v261
    %294 = vmatprep.subr.mxu0 0.0
    %295 = vmatpush1.msra.mxu0 %v262
    %296 = vmatprep.subr.mxu0 0.0
    %297 = vmatpush1.msra.mxu0 %v263
    %298 = vmatprep.subr.mxu0 0.0
    %299 = vmatpush1.msra.mxu0 %v264
    %300 = vmatprep.subr.mxu0 0.0
    %301 = vmatpush1.msra.mxu0 %v265
    %302 = vmatprep.subr.mxu0 0.0
    %303 = vmatpush1.msra.mxu0 0.0
    %304 = vmatprep.subr.mxu0 0.0
    %305 = vmatpush1.msra.mxu0 0.0
    %306 = vmatprep.subr.mxu0 0.0
    %307 = vmatpush1.msra.mxu0 0.0
    %308 = vmatprep.subr.mxu0 0.0
    %309 = vmatpush1.msra.mxu0 0.0
    %310 = vmatprep.subr.mxu0 0.0
    %311 = vmatpush1.msra.mxu0 0.0
    %312 = vmatprep.subr.mxu0 0.0
    %313 = vmatpush1.msra.mxu0 0.0
    %314 = vmatprep.subr.mxu0 0.0
    %315 = vmatpush1.msra.mxu0 0.0
    %316 = vmatprep.subr.mxu0 0.0
    %317 = vmatpush1.msra.mxu0 0.0
    %318 = vmatprep.subr.mxu0 0.0
    %319 = vmatpush1.msra.mxu0 0.0
    %320 = vmatprep.subr.mxu0 0.0
    %321 = vmatpush1.msra.mxu0 0.0
    %322 = vmatprep.subr.mxu0 0.0
    %323 = vmatpush1.msra.mxu0 0.0
    %324 = vmatprep.subr.mxu0 0.0
    %325 = vmatpush1.msra.mxu0 0.0
    %326 = vmatprep.subr.mxu0 0.0
    %327 = vmatpush1.msra.mxu0 0.0
    %328 = vmatprep.subr.mxu0 0.0
    %329 = vmatpush1.msra.mxu0 0.0
    %330 = vmatprep.subr.mxu0 0.0
    %331 = vmatpush1.msra.mxu0 0.0
    %332 = vmatprep.subr.mxu0 0.0
    %333 = vmatpush1.msra.mxu0 0.0
    %334 = vmatprep.mubr.f32.mxu0 0.0
    %335 = vmatmul.mubr.f32.gmra.mrb[0].mxu0 %v249
    %v336 = vpop.f32.mrb[0].mxu0
    %v337 = vadd.f32 %v269, %v336
    %v338 = vpop.f32.mrb[0].mxu0
    %339 = vdwg.mxu0
    %340 = vst [vmem:[#allocation10] sm:$0xff] %v337
    // Predicated region
    $region38: #{tpu_custom_call.1} parent=1 // pred_check
      _
    $region39: #{tpu_custom_call.1} parent=1 // pred_check_branch
      %342 = sbr.rel (0) target = $region41
    $region40: #{tpu_custom_call.1} parent=1 // pred_region
      %s344 = ssub.s32 128, 128
      %345 = vsyncadd [#allocation4], %s344
      %s347 = sshll.u32 [#allocation10], 4
      %s348 = int_to_ptr.vmem [resolvable:$true] %s347
      %350 = dma.vmem_to_hbm [thread:$0]  %s348, 128, %s5, [#allocation4]
    $region41: #{tpu_custom_call.1} parent=1 // pred_fallthru
      _
    // Predicated region
    $region42: #{tpu_custom_call.1} parent=1 // pred_check
      _
    $region43: #{tpu_custom_call.1} parent=1 // pred_check_branch
      %352 = sbr.rel (0) target = $region45
    $region44: #{tpu_custom_call.1} parent=1 // pred_region
      %353 = dma.done [#allocation4], 128
    $region45: #{tpu_custom_call.1} parent=1 // pred_fallthru
      _
    %354 = vsyncpa [#allocation3], 1
    %355 = vsyncpa [#allocation6], 1
    %356 = vsyncpa [#allocation9], 1
    %357 = vsyncpa [#allocation4], 1

</llo_original>
